<compile_context>
chip_gen: v7x
topology: tpu7x:2x2x1
jax: 0.10.0
libtpu: 0.0.40
codegen_flags: <defaults>
</compile_context>

<pallas_src>
import functools

import jax
import jax.numpy as jnp
from jax.experimental import pallas as pl
from jax.experimental.pallas import tpu as pltpu


def _round_up(a, b):
    return ((a + b - 1) // b) * b


def _cdiv(a, b):
    return (a + b - 1) // b


def _tpu_memory_budget():
    """(physical VMEM bytes, vmem_limit_bytes handed to Mosaic)."""
    try:
        phys = int(pltpu.get_tpu_info().vmem_capacity_bytes)
    except Exception:
        phys = 64 * 1024 * 1024  # conservative (v7x-sized) fallback
    limit = max(32 * 1024 * 1024, min((phys * 3) // 4, 100 * 1024 * 1024))
    return phys, limit


# ----------------------------------------------------------------------------
# Phase 1 kernel: in-kernel patch assembly -> 4 accumulated MXU matmuls
#                 + per-band BatchNorm partials (masked against row padding)
# ----------------------------------------------------------------------------
def _conv_stats_kernel(xa_ref, xb_ref, w_ref, y_ref, stats_ref, *,
                       tile_rows, wo, th, ho):
    # xa_ref / xb_ref: ((th+1)*wo, 4*cin) bf16 band slabs for kw offset 0 / 1.
    # w_ref:           (4, 4*cin, coutp) bf16, sub-matrix index k = 2*dh + dw.
    acc = jnp.dot(xa_ref[0:tile_rows, :], w_ref[0],
                  preferred_element_type=jnp.float32)
    acc += jnp.dot(xb_ref[0:tile_rows, :], w_ref[1],
                   preferred_element_type=jnp.float32)
    acc += jnp.dot(xa_ref[wo:wo + tile_rows, :], w_ref[2],
                   preferred_element_type=jnp.float32)
    acc += jnp.dot(xb_ref[wo:wo + tile_rows, :], w_ref[3],
                   preferred_element_type=jnp.float32)

    # BatchNorm partials from the f32 accumulator (before the bf16 cast).
    # Rows belonging to zero-padded output rows (last band only) are masked so
    # they do not bias the batch statistics.
    oh0 = pl.program_id(1) * th
    nvalid = jnp.maximum(jnp.minimum(ho - oh0, th), 0) * wo
    row_ids = jax.lax.broadcasted_iota(jnp.int32, (tile_rows, 1), 0)
    acc_m = jnp.where(row_ids < nvalid, acc, 0.0)
    stats_ref[0:1, :] = jnp.sum(acc_m, axis=0, keepdims=True)
    stats_ref[1:2, :] = jnp.sum(acc_m * acc_m, axis=0, keepdims=True)

    # Conv intermediate stored in bf16: halves phase-1 writes / phase-2 reads.
    y_ref[...] = acc.astype(y_ref.dtype)


# ----------------------------------------------------------------------------
# Phase 2 kernel: elementwise BatchNorm affine + LeakyReLU (f32 arithmetic)
# ----------------------------------------------------------------------------
def _bn_lrelu_kernel(y_ref, scale_ref, shift_ref, o_ref, *, neg_slope):
    y = y_ref[...].astype(jnp.float32)
    yh = y * scale_ref[...] + shift_ref[...]
    o_ref[...] = jnp.where(yh >= 0, yh, neg_slope * yh).astype(o_ref.dtype)


def block_forward(x_nchw, weight_oihw, gamma, beta, *, stride=2, padding=1,
                  eps=1e-5, neg_slope=0.2):
    """Forward pass of `Block` (down_sampling=True, use_dropout=False).

    x_nchw:      (N, Cin, H, W)    float32
    weight_oihw: (Cout, Cin, 4, 4) float32  (PyTorch Conv2d weight layout)
    gamma, beta: (Cout,)           BatchNorm affine params
    returns:     (N, Cout, Ho, Wo) float32
    """
    n, cin, h, w = x_nchw.shape
    cout, _, k, _ = weight_oihw.shape
    assert k == 4 and stride == 2 and padding == 1, "specialized to k=4, s=2, p=1"
    ho = (h + 2 * padding - k) // stride + 1
    wo = (w + 2 * padding - k) // stride + 1
    m = n * ho * wo
    c4 = 4 * cin
    lane = 128
    coutp = _round_up(cout, lane)

    phys_vmem, vmem_limit = _tpu_memory_budget()
    row_target = 1024 if phys_vmem >= 96 * 1024 * 1024 else 512

    # ---- choose the per-grid-step band of output rows (tile_m = th*wo) ----
    th_cap = max(1, min(row_target // max(wo, 1), ho))
    num_bands = _cdiv(ho, th_cap)
    # v7x has two TensorCores: keep >= 2 "parallel" grid steps (even if cheap).
    if n * num_bands < 2 and ho >= 2:
        num_bands = 2
    if (n % 2 == 1) and (num_bands % 2 == 1) and num_bands < ho:
        num_bands += 1
    th = _cdiv(ho, num_bands)       # rebalanced -> minimal row padding
    ho_pad = th * num_bands
    tile_rows = th * wo
    band_rows = (th + 1) * wo

    # ---- glue (plain JAX): reflect pad + space-to-depth(2), bf16 ----
    x_nhwc = jnp.transpose(x_nchw, (0, 2, 3, 1))
    x_pad = jnp.pad(
        x_nhwc, ((0, 0), (padding, padding), (padding, padding), (0, 0)),
        mode="reflect")
    hp, wp = h + 2 * padding, w + 2 * padding            # even for k=4,s=2,p=1
    s2d = x_pad.reshape(n, hp // 2, 2, wp // 2, 2, cin)
    s2d = jnp.transpose(s2d, (0, 1, 3, 2, 4, 5)).reshape(n, hp // 2, wp // 2, c4)
    s2d = s2d.astype(jnp.bfloat16)                       # (n, ho+1, wo+1, 4cin)
    if ho_pad > ho:
        s2d = jnp.pad(s2d, ((0, 0), (0, ho_pad - ho), (0, 0), (0, 0)))

    # Overlapping bands (th+1 s2d rows each, ~1/th duplication) so every
    # phase-1 grid step reads one rectangular slab -> no HBM im2col matrix.
    row_idx = jnp.arange(num_bands)[:, None] * th + jnp.arange(th + 1)[None, :]
    bands = s2d[:, row_idx]                              # (n, nb, th+1, wo+1, c4)
    xa = bands[:, :, :, 0:wo, :].reshape(n, num_bands, band_rows, c4)
    xb = bands[:, :, :, 1:wo + 1, :].reshape(n, num_bands, band_rows, c4)

    # weight (cout, cin, 4, 4) -> 4 sub-matrices (dh, dw) of (4*cin, coutp)
    wr = weight_oihw.reshape(cout, cin, 2, 2, 2, 2)      # (co, ci, dh, a, dw, b)
    w_sub = jnp.transpose(wr, (2, 4, 3, 5, 1, 0)).reshape(4, c4, cout)
    w_sub = jnp.pad(w_sub, ((0, 0), (0, 0), (0, coutp - cout))).astype(jnp.bfloat16)

    m_pad = n * num_bands * tile_rows

    # ---- phase 1: conv matmuls + per-band partial stats ----
    cost = pl.CostEstimate(
        flops=2 * m_pad * (4 * c4) * coutp,
        transcendentals=0,
        bytes_accessed=(2 * n * num_bands * band_rows * c4 * 2
                        + 4 * c4 * coutp * 2
                        + m_pad * coutp * 2
                        + n * num_bands * 2 * coutp * 4))

    y_conv, part_stats = pl.pallas_call(
        functools.partial(_conv_stats_kernel, tile_rows=tile_rows, wo=wo,
                          th=th, ho=ho),
        out_shape=(
            jax.ShapeDtypeStruct((n, num_bands, tile_rows, coutp), jnp.bfloat16),
            jax.ShapeDtypeStruct((n, num_bands, 2, coutp), jnp.float32),
        ),
        grid=(n, num_bands),
        in_specs=[
            pl.BlockSpec((None, None, band_rows, c4), lambda i, b: (i, b, 0, 0)),
            pl.BlockSpec((None, None, band_rows, c4), lambda i, b: (i, b, 0, 0)),
            # Constant-index weight block (re-fetch is skipped automatically).
            pl.BlockSpec((4, c4, coutp), lambda i, b: (0, 0, 0)),
        ],
        out_specs=(
            pl.BlockSpec((None, None, tile_rows, coutp), lambda i, b: (i, b, 0, 0)),
            pl.BlockSpec((None, None, 2, coutp), lambda i, b: (i, b, 0, 0)),
        ),
        compiler_params=pltpu.CompilerParams(
            dimension_semantics=("parallel", "parallel"),
            vmem_limit_bytes=vmem_limit),
        cost_estimate=cost,
    )(xa, xb, w_sub)

    # ---- tiny cross-band reduction; fold BN affine into scale/shift ----
    sums = jnp.sum(part_stats[:, :, 0, :], axis=(0, 1))
    sqs = jnp.sum(part_stats[:, :, 1, :], axis=(0, 1))
    mean = sums / m                                      # training-mode biased stats
    # TODO(synk): single-pass E[x^2]-E[x]^2 loses precision when |mean|>>std;
    #             fine at these tolerances, switch to a shifted combine if needed.
    var = jnp.maximum(sqs / m - mean * mean, 0.0)
    inv = jax.lax.rsqrt(var + eps)
    gamma_p = jnp.pad(gamma.astype(jnp.float32), (0, coutp - cout))
    beta_p = jnp.pad(beta.astype(jnp.float32), (0, coutp - cout))
    scale = (gamma_p * inv).reshape(1, coutp)
    shift = (beta_p - mean * gamma_p * inv).reshape(1, coutp)

    # ---- phase 2: elementwise BN affine + LeakyReLU, larger mem-bound tiles ----
    y2 = y_conv.reshape(m_pad, coutp)                    # trivial (free) reshape
    total_bands = n * num_bands
    target2 = 8 * row_target                             # rows per phase-2 block
    g_best = 1
    for g in range(1, total_bands + 1):
        if total_bands % g:
            continue
        if g * tile_rows > target2:
            continue
        if total_bands >= 2 and total_bands // g < 2:
            continue                                     # keep both v7x cores busy
        g_best = g
    tile2 = g_best * tile_rows
    steps2 = total_bands // g_best
    if tile2 % 8 != 0 and tile2 != m_pad:
        tile2, steps2 = m_pad, 1                         # tiny odd-shaped layers

    out_p = pl.pallas_call(
        functools.partial(_bn_lrelu_kernel, neg_slope=neg_slope),
        out_shape=jax.ShapeDtypeStruct((m_pad, coutp), jnp.float32),
        grid=(steps2,),
        in_specs=[
            pl.BlockSpec((tile2, coutp), lambda i: (i, 0)),
            pl.BlockSpec((1, coutp), lambda i: (0, 0)),
            pl.BlockSpec((1, coutp), lambda i: (0, 0)),
        ],
        out_specs=pl.BlockSpec((tile2, coutp), lambda i: (i, 0)),
        compiler_params=pltpu.CompilerParams(
            dimension_semantics=("parallel",),
            vmem_limit_bytes=vmem_limit),
    )(y2, scale, shift)

    # Slice off row / Cout padding, back to NCHW f32 (module semantics).
    out = out_p.reshape(n, ho_pad, wo, coutp)[:, :ho, :, :cout]
    return jnp.transpose(out, (0, 3, 1, 2))


# ----------------------------------------------------------------------------
# Pure-JAX reference (for correctness check)
# ----------------------------------------------------------------------------
def block_reference(x_nchw, weight_oihw, gamma, beta, *, stride=2, padding=1,
                    eps=1e-5, neg_slope=0.2):
    x_pad = jnp.pad(x_nchw, ((0, 0), (0, 0), (padding, padding), (padding, padding)),
                    mode="reflect")
    y = jax.lax.conv_general_dilated(
        x_pad, weight_oihw, window_strides=(stride, stride), padding="VALID",
        dimension_numbers=("NCHW", "OIHW", "NCHW"),
        preferred_element_type=jnp.float32)
    mean = jnp.mean(y, axis=(0, 2, 3), keepdims=True)
    var = jnp.mean((y - mean) ** 2, axis=(0, 2, 3), keepdims=True)
    y_hat = (y - mean) * jax.lax.rsqrt(var + eps)
    y_hat = y_hat * gamma.reshape(1, -1, 1, 1) + beta.reshape(1, -1, 1, 1)
    return jnp.where(y_hat >= 0, y_hat, neg_slope * y_hat)


if __name__ == "__main__":
    key = jax.random.PRNGKey(0)
    k_x, k_w = jax.random.split(key)

    # Small shapes consistent with the module: N=2, Cin=4, H=W=16, Cout=8, K=4.
    N, Cin, H, W = 2, 4, 16, 16
    Cout, K = 8, 4

    x = jax.random.normal(k_x, (N, Cin, H, W), dtype=jnp.float32)
    weight = 0.1 * jax.random.normal(k_w, (Cout, Cin, K, K), dtype=jnp.float32)
    gamma = jnp.ones((Cout,), dtype=jnp.float32)   # BatchNorm2d default init
    beta = jnp.zeros((Cout,), dtype=jnp.float32)

    out = jax.block_until_ready(block_forward(x, weight, gamma, beta))
    assert out.shape == (N, Cout, H // 2, W // 2), out.shape

    # Check vs a reference fed the same bf16 input quantization the MXU sees
    # (extra slack for the bf16 conv intermediate).
    x_q = x.astype(jnp.bfloat16).astype(jnp.float32)
    w_q = weight.astype(jnp.bfloat16).astype(jnp.float32)
    ref_q = jax.block_until_ready(block_reference(x_q, w_q, gamma, beta))
    err_q = jnp.max(jnp.abs(out - ref_q))
    assert jnp.allclose(out, ref_q, atol=3e-2, rtol=3e-2), \
        f"max abs diff vs bf16-quantized ref {err_q}"

    # Loose sanity check vs the pure-f32 reference (bf16 MXU operands + bf16
    # conv intermediate).
    ref = jax.block_until_ready(block_reference(x, weight, gamma, beta))
    err = jnp.max(jnp.abs(out - ref))
    assert jnp.allclose(out, ref, atol=7e-2, rtol=7e-2), \
        f"max abs diff vs f32 ref {err}"

    print("KERNEL_OK")
</pallas_src>

<mosaic_0001>
module attributes {stable_mosaic.version = 11 : i64} {
  func.func @_conv_stats_kernel(%arg0: i32, %arg1: i32, %arg2: memref<1x1x72x16xbf16, #tpu.memory_space<vmem>>, %arg3: memref<1x1x72x16xbf16, #tpu.memory_space<vmem>>, %arg4: memref<4x16x128xbf16, #tpu.memory_space<vmem>>, %arg5: memref<1x1x64x128xbf16, #tpu.memory_space<vmem>>, %arg6: memref<1x1x2x128xf32, #tpu.memory_space<vmem>>) attributes {dimension_semantics = [#tpu.dimension_semantics<parallel>, #tpu.dimension_semantics<parallel>], iteration_bounds = array<i64: 2, 1>, scalar_prefetch = 0 : i64, scratch_operands = 0 : i64, tpu.core_type = #tpu.core_type<tc>, window_params = [{transform_indices = @transform_0, window_bounds = array<i64: 1, 1, 72, 16>}, {transform_indices = @transform_1, window_bounds = array<i64: 1, 1, 72, 16>}, {pipeline_mode = #tpu.pipeline_mode<synchronous>, transform_indices = @transform_2, window_bounds = array<i64: 4, 16, 128>}, {transform_indices = @transform_3, window_bounds = array<i64: 1, 1, 64, 128>}, {transform_indices = @transform_4, window_bounds = array<i64: 1, 1, 2, 128>}]} {
    %c0 = arith.constant 0 : index
    %c0_0 = arith.constant 0 : index
    %c0_1 = arith.constant 0 : index
    %c0_2 = arith.constant 0 : index
    %0 = vector.load %arg2[%c0, %c0_0, %c0_1, %c0_2] : memref<1x1x72x16xbf16, #tpu.memory_space<vmem>>, vector<1x1x64x16xbf16>
    %1 = vector.shape_cast %0 : vector<1x1x64x16xbf16> to vector<64x16xbf16>
    %c0_3 = arith.constant 0 : index
    %c0_4 = arith.constant 0 : index
    %c0_5 = arith.constant 0 : index
    %2 = vector.load %arg4[%c0_3, %c0_4, %c0_5] : memref<4x16x128xbf16, #tpu.memory_space<vmem>>, vector<1x16x128xbf16>
    %3 = vector.shape_cast %2 : vector<1x16x128xbf16> to vector<16x128xbf16>
    %cst = arith.constant dense<0.000000e+00> : vector<64x128xf32>
    %4 = tpu.matmul %1, %3, %cst {dimension_numbers = #tpu.dot_dimension_numbers<[1], [0], [0], [1], [0, 0, 1, 1], [], []>} : vector<64x16xbf16>, vector<16x128xbf16>, vector<64x128xf32> -> vector<64x128xf32>
    %c0_6 = arith.constant 0 : index
    %c0_7 = arith.constant 0 : index
    %c0_8 = arith.constant 0 : index
    %c0_9 = arith.constant 0 : index
    %5 = vector.load %arg3[%c0_6, %c0_7, %c0_8, %c0_9] : memref<1x1x72x16xbf16, #tpu.memory_space<vmem>>, vector<1x1x64x16xbf16>
    %6 = vector.shape_cast %5 : vector<1x1x64x16xbf16> to vector<64x16xbf16>
    %c1 = arith.constant 1 : index
    %c0_10 = arith.constant 0 : index
    %c0_11 = arith.constant 0 : index
    %7 = vector.load %arg4[%c1, %c0_10, %c0_11] : memref<4x16x128xbf16, #tpu.memory_space<vmem>>, vector<1x16x128xbf16>
    %8 = vector.shape_cast %7 : vector<1x16x128xbf16> to vector<16x128xbf16>
    %cst_12 = arith.constant dense<0.000000e+00> : vector<64x128xf32>
    %9 = tpu.matmul %6, %8, %cst_12 {dimension_numbers = #tpu.dot_dimension_numbers<[1], [0], [0], [1], [0, 0, 1, 1], [], []>} : vector<64x16xbf16>, vector<16x128xbf16>, vector<64x128xf32> -> vector<64x128xf32>
    %10 = arith.addf %4, %9 : vector<64x128xf32>
    %c0_13 = arith.constant 0 : index
    %c0_14 = arith.constant 0 : index
    %c8 = arith.constant 8 : index
    %c0_15 = arith.constant 0 : index
    %11 = vector.load %arg2[%c0_13, %c0_14, %c8, %c0_15] : memref<1x1x72x16xbf16, #tpu.memory_space<vmem>>, vector<1x1x64x16xbf16>
    %12 = vector.shape_cast %11 : vector<1x1x64x16xbf16> to vector<64x16xbf16>
    %c2 = arith.constant 2 : index
    %c0_16 = arith.constant 0 : index
    %c0_17 = arith.constant 0 : index
    %13 = vector.load %arg4[%c2, %c0_16, %c0_17] : memref<4x16x128xbf16, #tpu.memory_space<vmem>>, vector<1x16x128xbf16>
    %14 = vector.shape_cast %13 : vector<1x16x128xbf16> to vector<16x128xbf16>
    %cst_18 = arith.constant dense<0.000000e+00> : vector<64x128xf32>
    %15 = tpu.matmul %12, %14, %cst_18 {dimension_numbers = #tpu.dot_dimension_numbers<[1], [0], [0], [1], [0, 0, 1, 1], [], []>} : vector<64x16xbf16>, vector<16x128xbf16>, vector<64x128xf32> -> vector<64x128xf32>
    %16 = arith.addf %10, %15 : vector<64x128xf32>
    %c0_19 = arith.constant 0 : index
    %c0_20 = arith.constant 0 : index
    %c8_21 = arith.constant 8 : index
    %c0_22 = arith.constant 0 : index
    %17 = vector.load %arg3[%c0_19, %c0_20, %c8_21, %c0_22] : memref<1x1x72x16xbf16, #tpu.memory_space<vmem>>, vector<1x1x64x16xbf16>
    %18 = vector.shape_cast %17 : vector<1x1x64x16xbf16> to vector<64x16xbf16>
    %c3 = arith.constant 3 : index
    %c0_23 = arith.constant 0 : index
    %c0_24 = arith.constant 0 : index
    %19 = vector.load %arg4[%c3, %c0_23, %c0_24] : memref<4x16x128xbf16, #tpu.memory_space<vmem>>, vector<1x16x128xbf16>
    %20 = vector.shape_cast %19 : vector<1x16x128xbf16> to vector<16x128xbf16>
    %cst_25 = arith.constant dense<0.000000e+00> : vector<64x128xf32>
    %21 = tpu.matmul %18, %20, %cst_25 {dimension_numbers = #tpu.dot_dimension_numbers<[1], [0], [0], [1], [0, 0, 1, 1], [], []>} : vector<64x16xbf16>, vector<16x128xbf16>, vector<64x128xf32> -> vector<64x128xf32>
    %22 = arith.addf %16, %21 : vector<64x128xf32>
    %c8_i32 = arith.constant 8 : i32
    %23 = arith.muli %arg1, %c8_i32 : i32
    %c8_i32_26 = arith.constant 8 : i32
    %24 = arith.subi %c8_i32_26, %23 : i32
    %c8_i32_27 = arith.constant 8 : i32
    %25 = arith.minsi %24, %c8_i32_27 : i32
    %c0_i32 = arith.constant 0 : i32
    %26 = arith.maxsi %25, %c0_i32 : i32
    %c8_i32_28 = arith.constant 8 : i32
    %27 = arith.muli %26, %c8_i32_28 : i32
    %28 = tpu.iota {dimensions = array<i32: 0>} : vector<64x1xi32>
    %29 = vector.broadcast %27 : i32 to vector<64x1xi32>
    %30 = arith.cmpi slt, %28, %29 : vector<64x1xi32>
    %cst_29 = arith.constant 0.000000e+00 : f32
    %31 = vector.shape_cast %30 : vector<64x1xi1> to vector<64x1xi1>
    %32 = vector.broadcast %31 : vector<64x1xi1> to vector<64x128xi1>
    %33 = vector.broadcast %cst_29 : f32 to vector<64x128xf32>
    %34 = arith.select %32, %22, %33 : vector<64x128xi1>, vector<64x128xf32>
    %cst_30 = arith.constant dense<0.000000e+00> : vector<128xf32>
    %35 = vector.multi_reduction <add>, %34, %cst_30 [0] : vector<64x128xf32> to vector<128xf32>
    %36 = vector.shape_cast %35 : vector<128xf32> to vector<1x128xf32>
    %c0_31 = arith.constant 0 : index
    %c0_32 = arith.constant 0 : index
    %c0_33 = arith.constant 0 : index
    %c0_34 = arith.constant 0 : index
    %37 = vector.load %arg6[%c0_31, %c0_32, %c0_33, %c0_34] : memref<1x1x2x128xf32, #tpu.memory_space<vmem>>, vector<1x1x1x128xf32>
    %38 = vector.shape_cast %37 : vector<1x1x1x128xf32> to vector<1x128xf32>
    %39 = vector.shape_cast %36 : vector<1x128xf32> to vector<1x1x1x128xf32>
    tpu.vector_store %arg6[%c0_31, %c0_32, %c0_33, %c0_34], %39 {strides = array<i32>} : memref<1x1x2x128xf32, #tpu.memory_space<vmem>>, vector<1x1x1x128xf32>,
    %40 = arith.mulf %34, %34 : vector<64x128xf32>
    %cst_35 = arith.constant dense<0.000000e+00> : vector<128xf32>
    %41 = vector.multi_reduction <add>, %40, %cst_35 [0] : vector<64x128xf32> to vector<128xf32>
    %42 = vector.shape_cast %41 : vector<128xf32> to vector<1x128xf32>
    %c0_36 = arith.constant 0 : index
    %c0_37 = arith.constant 0 : index
    %c1_38 = arith.constant 1 : index
    %c0_39 = arith.constant 0 : index
    %43 = vector.load %arg6[%c0_36, %c0_37, %c1_38, %c0_39] : memref<1x1x2x128xf32, #tpu.memory_space<vmem>>, vector<1x1x1x128xf32>
    %44 = vector.shape_cast %43 : vector<1x1x1x128xf32> to vector<1x128xf32>
    %45 = vector.shape_cast %42 : vector<1x128xf32> to vector<1x1x1x128xf32>
    tpu.vector_store %arg6[%c0_36, %c0_37, %c1_38, %c0_39], %45 {strides = array<i32>} : memref<1x1x2x128xf32, #tpu.memory_space<vmem>>, vector<1x1x1x128xf32>,
    %46 = arith.truncf %22 : vector<64x128xf32> to vector<64x128xbf16>
    %c0_40 = arith.constant 0 : index
    %c0_41 = arith.constant 0 : index
    %c0_42 = arith.constant 0 : index
    %c0_43 = arith.constant 0 : index
    %47 = vector.load %arg5[%c0_40, %c0_41, %c0_42, %c0_43] : memref<1x1x64x128xbf16, #tpu.memory_space<vmem>>, vector<1x1x64x128xbf16>
    %48 = vector.shape_cast %47 : vector<1x1x64x128xbf16> to vector<64x128xbf16>
    %49 = vector.shape_cast %46 : vector<64x128xbf16> to vector<1x1x64x128xbf16>
    tpu.vector_store %arg5[%c0_40, %c0_41, %c0_42, %c0_43], %49 {strides = array<i32>} : memref<1x1x64x128xbf16, #tpu.memory_space<vmem>>, vector<1x1x64x128xbf16>,
    return
  }
  func.func @transform_0(%arg0: i32, %arg1: i32) -> (i32, i32, i32, i32) {
    %c0_i32 = arith.constant 0 : i32
    %c0_i32_0 = arith.constant 0 : i32
    %c0_i32_1 = arith.constant 0 : i32
    return %arg0, %arg1, %c0_i32, %c0_i32_0 : i32, i32, i32, i32
  }
  func.func @transform_1(%arg0: i32, %arg1: i32) -> (i32, i32, i32, i32) {
    %c0_i32 = arith.constant 0 : i32
    %c0_i32_0 = arith.constant 0 : i32
    %c0_i32_1 = arith.constant 0 : i32
    return %arg0, %arg1, %c0_i32, %c0_i32_0 : i32, i32, i32, i32
  }
  func.func @transform_2(%arg0: i32, %arg1: i32) -> (i32, i32, i32) {
    %c0_i32 = arith.constant 0 : i32
    %c0_i32_0 = arith.constant 0 : i32
    %c0_i32_1 = arith.constant 0 : i32
    %c0_i32_2 = arith.constant 0 : i32
    return %c0_i32, %c0_i32_0, %c0_i32_1 : i32, i32, i32
  }
  func.func @transform_3(%arg0: i32, %arg1: i32) -> (i32, i32, i32, i32) {
    %c0_i32 = arith.constant 0 : i32
    %c0_i32_0 = arith.constant 0 : i32
    %c0_i32_1 = arith.constant 0 : i32
    return %arg0, %arg1, %c0_i32, %c0_i32_0 : i32, i32, i32, i32
  }
  func.func @transform_4(%arg0: i32, %arg1: i32) -> (i32, i32, i32, i32) {
    %c0_i32 = arith.constant 0 : i32
    %c0_i32_0 = arith.constant 0 : i32
    %c0_i32_1 = arith.constant 0 : i32
    return %arg0, %arg1, %c0_i32, %c0_i32_0 : i32, i32, i32, i32
  }
}

</mosaic_0001>

<llo_original>
// kernel: tpu_custom_call.1
$region0: #{tpu_custom_call.1}
  #allocation0 [shape = 'u32[]', space=smem, size = 0x4, offset = 0x4, fixed_abs, tag = 'smem constant byte address 0x4 - core index']
  #allocation1 [shape = 'u32[144,128]{1,0:T(1,128)}', space=vmem, size = 0x12000, scoped, tag = 'internal scratch']
  %s0 = inlined_call_operand.vmem [shape: bf16[2,1,72,16], index: 0, kind: input, shape index: {}]
  %s1 = inlined_call_operand.vmem [shape: bf16[2,1,72,16], index: 1, kind: input, shape index: {}]
  %s2 = inlined_call_operand.vmem [shape: bf16[4,16,128], index: 2, kind: input, shape index: {}]
  %s3 = inlined_call_operand.hbm [shape: bf16[2,1,64,128], index: 3, kind: output, shape index: {0}]
  %s4 = inlined_call_operand.hbm [shape: f32[2,1,2,128], index: 4, kind: output, shape index: {1}]
  %5 = xla_tuple %s3, %s4
  %s6 = sld [smem:[#allocation0]]
  $region53: #{tpu_custom_call.1} parent=0
    _
  %s8 = ssub.s32 1, %s6
  %s9 = scalar_select 0, %s8, %s6
  $region1: #{tpu_custom_call.1} parent=0
    #allocation2 [shape = 'u8[32768]{0}', space=vmem, size = 0x8000, scoped, tag = 'output window, operand 0']
    #allocation3 [shape = 's32[2]{0}', space=sflag, size = 0x8, scoped, tag = 'scoped memory for tpu_custom_call.1']
    #allocation4 [shape = 'u8[2048]{0}', space=vmem, size = 0x800, scoped, tag = 'output window, operand 1']
    #allocation5 [shape = 's32[2]{0}', space=sflag, size = 0x8, scoped, tag = 'scoped memory for tpu_custom_call.1']
    %10 = vsyncpa [#allocation3], 0
    %s11 = scalar_lea.sflag [#allocation3], 1
    %12 = vsyncpa %s11, 0
    %13 = vsyncpa [#allocation5], 0
    %s14 = scalar_lea.sflag [#allocation5], 1
    %15 = vsyncpa %s14, 0
    loop: start=0, step=1, limit=4
    $region2: #{tpu_custom_call.1} parent=1 // loop_pre_header
      _
    $region3: #{tpu_custom_call.1} parent=1 // loop_header
      %s17 = sphi 0, %s21
      %p18 = scmp.ge.s32.totalorder %s17, 4
      %s24 = sphi 0, %s36
      %s25 = sphi 0, %s32
      %s26 = sphi 0, %s24
      %s27 = sphi 0, %s25
      %s28 = sphi 0, %s26
      %s29 = sphi 0, %s27
      %s41 = sphi 0, %s43
      %s44 = sphi 0, %s41
      %s45 = sphi 0, %s44
      %s61 = sphi 0, %s45
      %s69 = sphi 0, %s71
      %s72 = sphi 0, %s69
      %s73 = sphi 0, %s72
      %s89 = sphi 0, %s73
      %s93 = sphi 0, %s93
      %s95 = sphi 0, %s93
      %s96 = sphi 0, %s95
      %s110 = sphi 0, %s96
      %s118 = sphi 0, %s120
      %s121 = sphi 0, %s118
      %s122 = sphi 0, %s121
      %s138 = sphi 0, %s122
      %s146 = sphi 0, %s148
      %s149 = sphi 0, %s146
      %s150 = sphi 0, %s149
      %s166 = sphi 0, %s150
    $region4: #{tpu_custom_call.1} parent=1 // loop_header_branch
      %20 = sbr.rel (%p18) target = $region8
    $region5: #{tpu_custom_call.1} parent=1 // loop_body
      %s22 = ssub.s32 %s17, 1
      %s23 = ssub.s32 %s17, 2
      %s30 = sadd.s32 1, %s25
      %p31 = scmp.ge.s32.totalorder %s30, 1
      %s32 = scalar_select %p31, 0, %s30
      %s33 = sadd.s32 1, %s24
      %s34 = scalar_select %p31, %s33, %s24
      %p35 = scmp.ge.s32.totalorder %s34, 2
      %s36 = scalar_select %p35, 0, %s34
      %s37 = ssub.s32 %s24, %s36
      %s38 = ssub.s32 %s25, %s32
      %s39 = sor.u32 %s37, %s38
      %p40 = scmp.eq.s32.totalorder %s39, 0
      %s42 = sadd.s32 %s41, 1
      %s43 = scalar_select %p40, %s41, %s42
      %p46 = pneg %p40
      %p47 = scmp.eq.s32.totalorder %s17, 1
      %p48 = por %p46, %p47
      %p49 = scmp.ne.s32.totalorder %s41, %s44
      %p50 = scmp.eq.s32.totalorder %s17, 0
      %p51 = por %p49, %p50
      %p52 = scmp.ne.s32.totalorder %s41, %s44
      %p53 = scmp.eq.s32.totalorder %s22, 1
      %p54 = por %p52, %p53
      %p55 = scmp.ne.s32.totalorder %s44, %s45
      %p56 = scmp.eq.s32.totalorder %s22, 0
      %p57 = por %p55, %p56
      %p58 = scmp.ne.s32.totalorder %s44, %s45
      %p59 = scmp.eq.s32.totalorder %s23, 1
      %p60 = por %p58, %p59
      %p62 = scmp.ne.s32.totalorder %s45, %s61
      %p63 = scmp.eq.s32.totalorder %s23, 0
      %p64 = por %p62, %p63
      %s65 = ssub.s32 %s24, %s36
      %s66 = ssub.s32 %s25, %s32
      %s67 = sor.u32 %s65, %s66
      %p68 = scmp.eq.s32.totalorder %s67, 0
      %s70 = sadd.s32 %s69, 1
      %s71 = scalar_select %p68, %s69, %s70
      %p74 = pneg %p68
      %p75 = scmp.eq.s32.totalorder %s17, 1
      %p76 = por %p74, %p75
      %p77 = scmp.ne.s32.totalorder %s69, %s72
      %p78 = scmp.eq.s32.totalorder %s17, 0
      %p79 = por %p77, %p78
      %p80 = scmp.ne.s32.totalorder %s69, %s72
      %p81 = scmp.eq.s32.totalorder %s22, 1
      %p82 = por %p80, %p81
      %p83 = scmp.ne.s32.totalorder %s72, %s73
      %p84 = scmp.eq.s32.totalorder %s22, 0
      %p85 = por %p83, %p84
      %p86 = scmp.ne.s32.totalorder %s72, %s73
      %p87 = scmp.eq.s32.totalorder %s23, 1
      %p88 = por %p86, %p87
      %p90 = scmp.ne.s32.totalorder %s73, %s89
      %p91 = scmp.eq.s32.totalorder %s23, 0
      %p92 = por %p90, %p91
      %s94 = sadd.s32 %s93, 1
      %p97 = scmp.eq.s32.totalorder %s17, 1
      %p98 = scmp.ne.s32.totalorder %s93, %s95
      %p99 = scmp.eq.s32.totalorder %s17, 0
      %p100 = por %p98, %p99
      %p101 = scmp.ne.s32.totalorder %s93, %s95
      %p102 = scmp.eq.s32.totalorder %s22, 1
      %p103 = por %p101, %p102
      %p104 = scmp.ne.s32.totalorder %s95, %s96
      %p105 = scmp.eq.s32.totalorder %s22, 0
      %p106 = por %p104, %p105
      %p107 = scmp.ne.s32.totalorder %s95, %s96
      %p108 = scmp.eq.s32.totalorder %s23, 1
      %p109 = por %p107, %p108
      %p111 = scmp.ne.s32.totalorder %s96, %s110
      %p112 = scmp.eq.s32.totalorder %s23, 0
      %p113 = por %p111, %p112
      %s114 = ssub.s32 %s24, %s36
      %s115 = ssub.s32 %s25, %s32
      %s116 = sor.u32 %s114, %s115
      %p117 = scmp.eq.s32.totalorder %s116, 0
      %s119 = sadd.s32 %s118, 1
      %s120 = scalar_select %p117, %s118, %s119
      %p123 = pneg %p117
      %p124 = scmp.eq.s32.totalorder %s17, 1
      %p125 = por %p123, %p124
      %p126 = scmp.ne.s32.totalorder %s118, %s121
      %p127 = scmp.eq.s32.totalorder %s17, 0
      %p128 = por %p126, %p127
      %p129 = scmp.ne.s32.totalorder %s118, %s121
      %p130 = scmp.eq.s32.totalorder %s22, 1
      %p131 = por %p129, %p130
      %p132 = scmp.ne.s32.totalorder %s121, %s122
      %p133 = scmp.eq.s32.totalorder %s22, 0
      %p134 = por %p132, %p133
      %p135 = scmp.ne.s32.totalorder %s121, %s122
      %p136 = scmp.eq.s32.totalorder %s23, 1
      %p137 = por %p135, %p136
      %p139 = scmp.ne.s32.totalorder %s122, %s138
      %p140 = scmp.eq.s32.totalorder %s23, 0
      %p141 = por %p139, %p140
      %s142 = ssub.s32 %s24, %s36
      %s143 = ssub.s32 %s25, %s32
      %s144 = sor.u32 %s142, %s143
      %p145 = scmp.eq.s32.totalorder %s144, 0
      %s147 = sadd.s32 %s146, 1
      %s148 = scalar_select %p145, %s146, %s147
      %p151 = pneg %p145
      %p152 = scmp.eq.s32.totalorder %s17, 1
      %p153 = por %p151, %p152
      %p154 = scmp.ne.s32.totalorder %s146, %s149
      %p155 = scmp.eq.s32.totalorder %s17, 0
      %p156 = por %p154, %p155
      %p157 = scmp.ne.s32.totalorder %s146, %s149
      %p158 = scmp.eq.s32.totalorder %s22, 1
      %p159 = por %p157, %p158
      %p160 = scmp.ne.s32.totalorder %s149, %s150
      %p161 = scmp.eq.s32.totalorder %s22, 0
      %p162 = por %p160, %p161
      %p163 = scmp.ne.s32.totalorder %s149, %s150
      %p164 = scmp.eq.s32.totalorder %s23, 1
      %p165 = por %p163, %p164
      %p167 = scmp.ne.s32.totalorder %s150, %s166
      %p168 = scmp.eq.s32.totalorder %s23, 0
      %p169 = por %p167, %p168
      %p170 = scmp.le.s32.totalorder 1, %s17
      %p171 = scmp.lt.s32.totalorder %s17, 3
      %p172 = pnand %p170, %p171
      %p173 = pneg %p172
      // Predicated region
      $region9: #{tpu_custom_call.1} parent=5 // pred_check
        _
      $region10: #{tpu_custom_call.1} parent=5 // pred_check_branch
        %175 = sbr.rel (%p172) target = $region12
      $region11: #{tpu_custom_call.1} parent=5 // pred_region
        %s176 = ssub.s32 %s17, 1
        // Predicated region
        $region13: #{tpu_custom_call.1} parent=11 // pred_check
          %p177 = pneg %p106
        $region14: #{tpu_custom_call.1} parent=11 // pred_check_branch
          %179 = sbr.rel (%p177) target = $region16
        $region15: #{tpu_custom_call.1} parent=11 // pred_region
          _
        $region16: #{tpu_custom_call.1} parent=11 // pred_fallthru
          _
      $region12: #{tpu_custom_call.1} parent=5 // pred_fallthru
        _
      %p180 = scmp.lt.s32.totalorder %s17, 2
      // Predicated region
      $region17: #{tpu_custom_call.1} parent=5 // pred_check
        %p181 = pneg %p180
      $region18: #{tpu_custom_call.1} parent=5 // pred_check_branch
        %183 = sbr.rel (%p181) target = $region20
      $region19: #{tpu_custom_call.1} parent=5 // pred_region
        // Predicated region
        $region21: #{tpu_custom_call.1} parent=19 // pred_check
          %p184 = pneg %p51
        $region22: #{tpu_custom_call.1} parent=19 // pred_check_branch
          %186 = sbr.rel (%p184) target = $region24
        $region23: #{tpu_custom_call.1} parent=19 // pred_region
          %p187 = scmp.lt.s32.totalorder %s24, 1
          %s188 = scalar_select %p187, %s24, 1
          %p189 = scmp.lt.s32.totalorder %s25, 0
          %s190 = scalar_select %p189, %s25, 0
          %s191 = smul.addr %s190, 9
          %s192 = smul.addr %s188, 9
          %s193 = sadd.s32 %s191, %s192
          %s194 = smul.addr %s193, 4
          %s195 = scalar_lea.vmem %s0, %s194
        $region24: #{tpu_custom_call.1} parent=19 // pred_fallthru
          _
        // Predicated region
        $region25: #{tpu_custom_call.1} parent=19 // pred_check
          %p196 = pneg %p79
        $region26: #{tpu_custom_call.1} parent=19 // pred_check_branch
          %198 = sbr.rel (%p196) target = $region28
        $region27: #{tpu_custom_call.1} parent=19 // pred_region
          %p199 = scmp.lt.s32.totalorder %s24, 1
          %s200 = scalar_select %p199, %s24, 1
          %p201 = scmp.lt.s32.totalorder %s25, 0
          %s202 = scalar_select %p201, %s25, 0
          %s203 = smul.addr %s202, 9
          %s204 = smul.addr %s200, 9
          %s205 = sadd.s32 %s203, %s204
          %s206 = smul.addr %s205, 4
          %s207 = scalar_lea.vmem %s1, %s206
        $region28: #{tpu_custom_call.1} parent=19 // pred_fallthru
          _
      $region20: #{tpu_custom_call.1} parent=5 // pred_fallthru
        _
      %p208 = scmp.le.s32.totalorder 1, %s17
      %p209 = scmp.lt.s32.totalorder %s17, 3
      %p210 = pnand %p208, %p209
      %p211 = pneg %p210
      // Predicated region
      $region29: #{tpu_custom_call.1} parent=5 // pred_check
        _
      $region30: #{tpu_custom_call.1} parent=5 // pred_check_branch
        %213 = sbr.rel (%p210) target = $region32
      $region31: #{tpu_custom_call.1} parent=5 // pred_region
        %s214 = ssub.s32 %s17, 1
        %p215 = scmp.lt.s32.totalorder %s26, 1
        %s216 = scalar_select %p215, %s26, 1
        %p217 = scmp.lt.s32.totalorder %s27, 0
        %s218 = scalar_select %p217, %s27, 0
        %s219 = smul.addr %s218, 9
        %s220 = smul.addr %s216, 9
        %s221 = sadd.s32 %s219, %s220
        %s222 = smul.addr %s221, 4
        %s223 = scalar_lea.vmem %s0, %s222
        %p224 = pneg %p57
        %p225 = pneg %p54
        %p226 = scmp.lt.s32.totalorder %s26, 1
        %s227 = scalar_select %p226, %s26, 1
        %p228 = scmp.lt.s32.totalorder %s27, 0
        %s229 = scalar_select %p228, %s27, 0
        %s230 = smul.addr %s229, 9
        %s231 = smul.addr %s227, 9
        %s232 = sadd.s32 %s230, %s231
        %s233 = smul.addr %s232, 4
        %s234 = scalar_lea.vmem %s1, %s233
        %p235 = pneg %p85
        %p236 = pneg %p82
        %p237 = pneg %p106
        %p238 = pneg %p103
        %p239 = pneg %p134
        %p240 = pneg %p131
        %s241 = sand.u32 %s121, 1
        %s242 = scalar_lea.sflag [#allocation3], %s241
        %s243 = sand.u32 %s121, 1
        %s244 = smul.addr %s243, 32
        %s245 = scalar_lea.vmem [#allocation2], %s244
        %p246 = pneg %p162
        %p247 = pneg %p159
        %s248 = sand.u32 %s149, 1
        %s249 = scalar_lea.sflag [#allocation5], %s248
        %s250 = sand.u32 %s149, 1
        %s251 = smul.addr %s250, 2
        %s252 = scalar_lea.vmem [#allocation4], %s251
        %p253 = scmp.lt.s32.totalorder %s26, 1
        %s254 = scalar_select %p253, %s26, 1
        %p255 = scmp.lt.s32.totalorder %s27, 0
        %s256 = scalar_select %p255, %s27, 0
        %s257 = smul.addr %s256, 9
        %s258 = smul.addr %s254, 9
        %s259 = sadd.s32 %s257, %s258
        %s260 = smul.addr %s259, 4
        %s261 = scalar_lea.vmem %s0, %s260
        %p262 = scmp.lt.s32.totalorder %s26, 1
        %s263 = scalar_select %p262, %s26, 1
        %p264 = scmp.lt.s32.totalorder %s27, 0
        %s265 = scalar_select %p264, %s27, 0
        %s266 = smul.addr %s265, 9
        %s267 = smul.addr %s263, 9
        %s268 = sadd.s32 %s266, %s267
        %s269 = smul.addr %s268, 4
        %s270 = scalar_lea.vmem %s1, %s269
        %v272 = vld [vmem:[%s261] sm:$0xf]
        %v273 = vld [vmem:[%s261 + $0x4] sm:$0xf]
        %v274 = vld [vmem:[%s261 + $0x8] sm:$0xf]
        %v275 = vld [vmem:[%s261 + $0xc] sm:$0xf]
        %v276 = vld [vmem:[%s261 + $0x10] sm:$0xf]
        %v277 = vld [vmem:[%s261 + $0x14] sm:$0xf]
        %v278 = vld [vmem:[%s261 + $0x18] sm:$0xf]
        %v279 = vld [vmem:[%s261 + $0x1c] sm:$0xf]
        %v280 = vld [vmem:[%s2] sm:$0xf]
        %v281 = vld [vmem:[%s2 + $0x4] sm:$0xf]
        %v282 = vld [vmem:[%s270] sm:$0xf]
        %v283 = vld [vmem:[%s270 + $0x4] sm:$0xf]
        %v284 = vld [vmem:[%s270 + $0x8] sm:$0xf]
        %v285 = vld [vmem:[%s270 + $0xc] sm:$0xf]
        %v286 = vld [vmem:[%s270 + $0x10] sm:$0xf]
        %v287 = vld [vmem:[%s270 + $0x14] sm:$0xf]
        %v288 = vld [vmem:[%s270 + $0x18] sm:$0xf]
        %v289 = vld [vmem:[%s270 + $0x1c] sm:$0xf]
        %s290 = scalar_lea.vmem %s2, 8
        %v291 = vld [vmem:[%s290] sm:$0xf]
        %v292 = vld [vmem:[%s290 + $0x4] sm:$0xf]
        %v301 = vunpack.c.l.b16 %v282
        %v302 = vunpack.c.l.b16 %v283
        %v303 = vunpack.c.l.b16 %v284
        %v304 = vunpack.c.l.b16 %v285
        %v305 = vunpack.c.l.b16 %v286
        %v306 = vunpack.c.l.b16 %v287
        %v307 = vunpack.c.l.b16 %v288
        %v308 = vunpack.c.l.b16 %v289
        %v309 = vpack.c.b16 %v302, %v301
        %v310 = vpack.c.b16 %v304, %v303
        %v311 = vpack.c.b16 %v306, %v305
        %v312 = vpack.c.b16 %v308, %v307
        %v315 = vunpack.c.l.b16 %v291
        %v316 = vunpack.c.l.b16 %v292
        %v317 = vpack.c.b16 %v316, %v315
        %vm319 = vcmask 130048
        %v321 = vsel %vm319, %v309, 0
        %v324 = vsel %vm319, %v310, 0
        %v327 = vsel %vm319, %v311, 0
        %v330 = vsel %vm319, %v312, 0
        %332 = vmatprep.subr.bf16.mxu0 0
        %333 = vmatpush1.bf16.msra.mxu0 %v317
        %334 = vmatprep.subr.bf16.mxu0 0
        %335 = vmatpush1.bf16.msra.mxu0 0
        %336 = vmatprep.subr.bf16.mxu0 0
        %337 = vmatpush1.bf16.msra.mxu0 0
        %338 = vmatprep.subr.bf16.mxu0 0
        %339 = vmatpush1.bf16.msra.mxu0 0
        %340 = vmatprep.subr.bf16.mxu0 0
        %341 = vmatpush1.bf16.msra.mxu0 0
        %342 = vmatprep.subr.bf16.mxu0 0
        %343 = vmatpush1.bf16.msra.mxu0 0
        %344 = vmatprep.subr.bf16.mxu0 0
        %345 = vmatpush1.bf16.msra.mxu0 0
        %346 = vmatprep.subr.bf16.mxu0 0
        %347 = vmatpush1.bf16.msra.mxu0 0
        %348 = vmatprep.subr.bf16.mxu0 0
        %349 = vmatpush1.bf16.msra.mxu0 0
        %350 = vmatprep.subr.bf16.mxu0 0
        %351 = vmatpush1.bf16.msra.mxu0 0
        %352 = vmatprep.subr.bf16.mxu0 0
        %353 = vmatpush1.bf16.msra.mxu0 0
        %354 = vmatprep.subr.bf16.mxu0 0
        %355 = vmatpush1.bf16.msra.mxu0 0
        %356 = vmatprep.subr.bf16.mxu0 0
        %357 = vmatpush1.bf16.msra.mxu0 0
        %358 = vmatprep.subr.bf16.mxu0 0
        %359 = vmatpush1.bf16.msra.mxu0 0
        %360 = vmatprep.subr.bf16.mxu0 0
        %361 = vmatpush1.bf16.msra.mxu0 0
        %362 = vmatprep.subr.bf16.mxu0 0
        %363 = vmatpush1.bf16.msra.mxu0 0
        %364 = vmatprep.mubr.bf16.mxu0 0
        %365 = vmatmul.mubr.bf16.gmra.mrb[0].mxu0 %v321
        %v366 = vpop.f32.mrb[0].mxu0
        %v367 = vadd.f32 0.0, %v366
        %v368 = vpop.f32.mrb[0].mxu0
        %v369 = vpop.f32.mrb[0].mxu0
        %v370 = vadd.f32 0.0, %v369
        %v371 = vpop.f32.mrb[0].mxu0
        %372 = vmatprep.mubr.bf16.mxu0 0
        %373 = vmatmul.mubr.bf16.gmra.mrb[0].mxu0 %v324
        %v374 = vpop.f32.mrb[0].mxu0
        %v375 = vadd.f32 0.0, %v374
        %v376 = vpop.f32.mrb[0].mxu0
        %v377 = vpop.f32.mrb[0].mxu0
        %v378 = vadd.f32 0.0, %v377
        %v379 = vpop.f32.mrb[0].mxu0
        %380 = vmatprep.mubr.bf16.mxu0 0
        %381 = vmatmul.mubr.bf16.gmra.mrb[0].mxu0 %v327
        %v382 = vpop.f32.mrb[0].mxu0
        %v383 = vadd.f32 0.0, %v382
        %v384 = vpop.f32.mrb[0].mxu0
        %v385 = vpop.f32.mrb[0].mxu0
        %v386 = vadd.f32 0.0, %v385
        %v387 = vpop.f32.mrb[0].mxu0
        %388 = vmatprep.mubr.bf16.mxu0 0
        %389 = vmatmul.mubr.bf16.gmra.mrb[0].mxu0 %v330
        %v390 = vpop.f32.mrb[0].mxu0
        %v391 = vadd.f32 0.0, %v390
        %v392 = vpop.f32.mrb[0].mxu0
        %v393 = vpop.f32.mrb[0].mxu0
        %v394 = vadd.f32 0.0, %v393
        %v395 = vpop.f32.mrb[0].mxu0
        %396 = vdwg.mxu0
        %v405 = vunpack.c.l.b16 %v272
        %v406 = vunpack.c.l.b16 %v273
        %v407 = vunpack.c.l.b16 %v274
        %v408 = vunpack.c.l.b16 %v275
        %v409 = vunpack.c.l.b16 %v276
        %v410 = vunpack.c.l.b16 %v277
        %v411 = vunpack.c.l.b16 %v278
        %v412 = vunpack.c.l.b16 %v279
        %v413 = vpack.c.b16 %v406, %v405
        %v414 = vpack.c.b16 %v408, %v407
        %v415 = vpack.c.b16 %v410, %v409
        %v416 = vpack.c.b16 %v412, %v411
        %v419 = vunpack.c.l.b16 %v280
        %v420 = vunpack.c.l.b16 %v281
        %v421 = vpack.c.b16 %v420, %v419
        %v424 = vsel %vm319, %v413, 0
        %v427 = vsel %vm319, %v414, 0
        %v430 = vsel %vm319, %v415, 0
        %v433 = vsel %vm319, %v416, 0
        %435 = vmatprep.subr.bf16.mxu0 0
        %436 = vmatpush1.bf16.msra.mxu0 %v421
        %437 = vmatprep.subr.bf16.mxu0 0
        %438 = vmatpush1.bf16.msra.mxu0 0
        %439 = vmatprep.subr.bf16.mxu0 0
        %440 = vmatpush1.bf16.msra.mxu0 0
        %441 = vmatprep.subr.bf16.mxu0 0
        %442 = vmatpush1.bf16.msra.mxu0 0
        %443 = vmatprep.subr.bf16.mxu0 0
        %444 = vmatpush1.bf16.msra.mxu0 0
        %445 = vmatprep.subr.bf16.mxu0 0
        %446 = vmatpush1.bf16.msra.mxu0 0
        %447 = vmatprep.subr.bf16.mxu0 0
        %448 = vmatpush1.bf16.msra.mxu0 0
        %449 = vmatprep.subr.bf16.mxu0 0
        %450 = vmatpush1.bf16.msra.mxu0 0
        %451 = vmatprep.subr.bf16.mxu0 0
        %452 = vmatpush1.bf16.msra.mxu0 0
        %453 = vmatprep.subr.bf16.mxu0 0
        %454 = vmatpush1.bf16.msra.mxu0 0
        %455 = vmatprep.subr.bf16.mxu0 0
        %456 = vmatpush1.bf16.msra.mxu0 0
        %457 = vmatprep.subr.bf16.mxu0 0
        %458 = vmatpush1.bf16.msra.mxu0 0
        %459 = vmatprep.subr.bf16.mxu0 0
        %460 = vmatpush1.bf16.msra.mxu0 0
        %461 = vmatprep.subr.bf16.mxu0 0
        %462 = vmatpush1.bf16.msra.mxu0 0
        %463 = vmatprep.subr.bf16.mxu0 0
        %464 = vmatpush1.bf16.msra.mxu0 0
        %465 = vmatprep.subr.bf16.mxu0 0
        %466 = vmatpush1.bf16.msra.mxu0 0
        %467 = vmatprep.mubr.bf16.mxu0 0
        %468 = vmatmul.mubr.bf16.gmra.mrb[0].mxu0 %v424
        %v469 = vpop.f32.mrb[0].mxu0
        %v470 = vadd.f32 %v367, %v469
        %v471 = vpop.f32.mrb[0].mxu0
        %v472 = vpop.f32.mrb[0].mxu0
        %v473 = vadd.f32 %v370, %v472
        %v474 = vpop.f32.mrb[0].mxu0
        %475 = vmatprep.mubr.bf16.mxu0 0
        %476 = vmatmul.mubr.bf16.gmra.mrb[0].mxu0 %v427
        %v477 = vpop.f32.mrb[0].mxu0
        %v478 = vadd.f32 %v375, %v477
        %v479 = vpop.f32.mrb[0].mxu0
        %v480 = vpop.f32.mrb[0].mxu0
        %v481 = vadd.f32 %v378, %v480
        %v482 = vpop.f32.mrb[0].mxu0
        %483 = vmatprep.mubr.bf16.mxu0 0
        %484 = vmatmul.mubr.bf16.gmra.mrb[0].mxu0 %v430
        %v485 = vpop.f32.mrb[0].mxu0
        %v486 = vadd.f32 %v383, %v485
        %v487 = vpop.f32.mrb[0].mxu0
        %v488 = vpop.f32.mrb[0].mxu0
        %v489 = vadd.f32 %v386, %v488
        %v490 = vpop.f32.mrb[0].mxu0
        %491 = vmatprep.mubr.bf16.mxu0 0
        %492 = vmatmul.mubr.bf16.gmra.mrb[0].mxu0 %v433
        %v493 = vpop.f32.mrb[0].mxu0
        %v494 = vadd.f32 %v391, %v493
        %v495 = vpop.f32.mrb[0].mxu0
        %v496 = vpop.f32.mrb[0].mxu0
        %v497 = vadd.f32 %v394, %v496
        %v498 = vpop.f32.mrb[0].mxu0
        %499 = vdwg.mxu0
        %v500 = vld [vmem:[%s261 + $0x4] sm:$0xf]
        %v501 = vld [vmem:[%s261 + $0x8] sm:$0xf]
        %v502 = vld [vmem:[%s261 + $0xc] sm:$0xf]
        %v503 = vld [vmem:[%s261 + $0x10] sm:$0xf]
        %v504 = vld [vmem:[%s261 + $0x14] sm:$0xf]
        %v505 = vld [vmem:[%s261 + $0x18] sm:$0xf]
        %v506 = vld [vmem:[%s261 + $0x1c] sm:$0xf]
        %v507 = vld [vmem:[%s261 + $0x20] sm:$0xf]
        %s508 = scalar_lea.vmem %s2, 16
        %v509 = vld [vmem:[%s508] sm:$0xf]
        %v510 = vld [vmem:[%s508 + $0x4] sm:$0xf]
        %v519 = vunpack.c.l.b16 %v500
        %v520 = vunpack.c.l.b16 %v501
        %v521 = vunpack.c.l.b16 %v502
        %v522 = vunpack.c.l.b16 %v503
        %v523 = vunpack.c.l.b16 %v504
        %v524 = vunpack.c.l.b16 %v505
        %v525 = vunpack.c.l.b16 %v506
        %v526 = vunpack.c.l.b16 %v507
        %v527 = vpack.c.b16 %v520, %v519
        %v528 = vpack.c.b16 %v522, %v521
        %v529 = vpack.c.b16 %v524, %v523
        %v530 = vpack.c.b16 %v526, %v525
        %v533 = vunpack.c.l.b16 %v509
        %v534 = vunpack.c.l.b16 %v510
        %v535 = vpack.c.b16 %v534, %v533
        %v538 = vsel %vm319, %v527, 0
        %v541 = vsel %vm319, %v528, 0
        %v544 = vsel %vm319, %v529, 0
        %v547 = vsel %vm319, %v530, 0
        %549 = vmatprep.subr.bf16.mxu0 0
        %550 = vmatpush1.bf16.msra.mxu0 %v535
        %551 = vmatprep.subr.bf16.mxu0 0
        %552 = vmatpush1.bf16.msra.mxu0 0
        %553 = vmatprep.subr.bf16.mxu0 0
        %554 = vmatpush1.bf16.msra.mxu0 0
        %555 = vmatprep.subr.bf16.mxu0 0
        %556 = vmatpush1.bf16.msra.mxu0 0
        %557 = vmatprep.subr.bf16.mxu0 0
        %558 = vmatpush1.bf16.msra.mxu0 0
        %559 = vmatprep.subr.bf16.mxu0 0
        %560 = vmatpush1.bf16.msra.mxu0 0
        %561 = vmatprep.subr.bf16.mxu0 0
        %562 = vmatpush1.bf16.msra.mxu0 0
        %563 = vmatprep.subr.bf16.mxu0 0
        %564 = vmatpush1.bf16.msra.mxu0 0
        %565 = vmatprep.subr.bf16.mxu0 0
        %566 = vmatpush1.bf16.msra.mxu0 0
        %567 = vmatprep.subr.bf16.mxu0 0
        %568 = vmatpush1.bf16.msra.mxu0 0
        %569 = vmatprep.subr.bf16.mxu0 0
        %570 = vmatpush1.bf16.msra.mxu0 0
        %571 = vmatprep.subr.bf16.mxu0 0
        %572 = vmatpush1.bf16.msra.mxu0 0
        %573 = vmatprep.subr.bf16.mxu0 0
        %574 = vmatpush1.bf16.msra.mxu0 0
        %575 = vmatprep.subr.bf16.mxu0 0
        %576 = vmatpush1.bf16.msra.mxu0 0
        %577 = vmatprep.subr.bf16.mxu0 0
        %578 = vmatpush1.bf16.msra.mxu0 0
        %579 = vmatprep.subr.bf16.mxu0 0
        %580 = vmatpush1.bf16.msra.mxu0 0
        %581 = vmatprep.mubr.bf16.mxu0 0
        %582 = vmatmul.mubr.bf16.gmra.mrb[0].mxu0 %v538
        %v583 = vpop.f32.mrb[0].mxu0
        %v584 = vadd.f32 0.0, %v583
        %v585 = vpop.f32.mrb[0].mxu0
        %v586 = vpop.f32.mrb[0].mxu0
        %v587 = vadd.f32 0.0, %v586
        %v588 = vpop.f32.mrb[0].mxu0
        %589 = vmatprep.mubr.bf16.mxu0 0
        %590 = vmatmul.mubr.bf16.gmra.mrb[0].mxu0 %v541
        %v591 = vpop.f32.mrb[0].mxu0
        %v592 = vadd.f32 0.0, %v591
        %v593 = vpop.f32.mrb[0].mxu0
        %v594 = vpop.f32.mrb[0].mxu0
        %v595 = vadd.f32 0.0, %v594
        %v596 = vpop.f32.mrb[0].mxu0
        %597 = vmatprep.mubr.bf16.mxu0 0
        %598 = vmatmul.mubr.bf16.gmra.mrb[0].mxu0 %v544
        %v599 = vpop.f32.mrb[0].mxu0
        %v600 = vadd.f32 0.0, %v599
        %v601 = vpop.f32.mrb[0].mxu0
        %v602 = vpop.f32.mrb[0].mxu0
        %v603 = vadd.f32 0.0, %v602
        %v604 = vpop.f32.mrb[0].mxu0
        %605 = vmatprep.mubr.bf16.mxu0 0
        %606 = vmatmul.mubr.bf16.gmra.mrb[0].mxu0 %v547
        %v607 = vpop.f32.mrb[0].mxu0
        %v608 = vadd.f32 0.0, %v607
        %v609 = vpop.f32.mrb[0].mxu0
        %v610 = vpop.f32.mrb[0].mxu0
        %v611 = vadd.f32 0.0, %v610
        %v612 = vpop.f32.mrb[0].mxu0
        %613 = vdwg.mxu0
        %v614 = vadd.f32 %v470, %v584
        %v615 = vadd.f32 %v473, %v587
        %v616 = vadd.f32 %v478, %v592
        %v617 = vadd.f32 %v481, %v595
        %v618 = vadd.f32 %v486, %v600
        %v619 = vadd.f32 %v489, %v603
        %v620 = vadd.f32 %v494, %v608
        %v621 = vadd.f32 %v497, %v611
        %v622 = vld [vmem:[%s270 + $0x4] sm:$0xf]
        %v623 = vld [vmem:[%s270 + $0x8] sm:$0xf]
        %v624 = vld [vmem:[%s270 + $0xc] sm:$0xf]
        %v625 = vld [vmem:[%s270 + $0x10] sm:$0xf]
        %v626 = vld [vmem:[%s270 + $0x14] sm:$0xf]
        %v627 = vld [vmem:[%s270 + $0x18] sm:$0xf]
        %v628 = vld [vmem:[%s270 + $0x1c] sm:$0xf]
        %v629 = vld [vmem:[%s270 + $0x20] sm:$0xf]
        %s630 = scalar_lea.vmem %s2, 24
        %v631 = vld [vmem:[%s630] sm:$0xf]
        %v632 = vld [vmem:[%s630 + $0x4] sm:$0xf]
        %v641 = vunpack.c.l.b16 %v622
        %v642 = vunpack.c.l.b16 %v623
        %v643 = vunpack.c.l.b16 %v624
        %v644 = vunpack.c.l.b16 %v625
        %v645 = vunpack.c.l.b16 %v626
        %v646 = vunpack.c.l.b16 %v627
        %v647 = vunpack.c.l.b16 %v628
        %v648 = vunpack.c.l.b16 %v629
        %v649 = vpack.c.b16 %v642, %v641
        %v650 = vpack.c.b16 %v644, %v643
        %v651 = vpack.c.b16 %v646, %v645
        %v652 = vpack.c.b16 %v648, %v647
        %v655 = vunpack.c.l.b16 %v631
        %v656 = vunpack.c.l.b16 %v632
        %v657 = vpack.c.b16 %v656, %v655
        %v660 = vsel %vm319, %v649, 0
        %v663 = vsel %vm319, %v650, 0
        %v666 = vsel %vm319, %v651, 0
        %v669 = vsel %vm319, %v652, 0
        %671 = vmatprep.subr.bf16.mxu0 0
        %672 = vmatpush1.bf16.msra.mxu0 %v657
        %673 = vmatprep.subr.bf16.mxu0 0
        %674 = vmatpush1.bf16.msra.mxu0 0
        %675 = vmatprep.subr.bf16.mxu0 0
        %676 = vmatpush1.bf16.msra.mxu0 0
        %677 = vmatprep.subr.bf16.mxu0 0
        %678 = vmatpush1.bf16.msra.mxu0 0
        %679 = vmatprep.subr.bf16.mxu0 0
        %680 = vmatpush1.bf16.msra.mxu0 0
        %681 = vmatprep.subr.bf16.mxu0 0
        %682 = vmatpush1.bf16.msra.mxu0 0
        %683 = vmatprep.subr.bf16.mxu0 0
        %684 = vmatpush1.bf16.msra.mxu0 0
        %685 = vmatprep.subr.bf16.mxu0 0
        %686 = vmatpush1.bf16.msra.mxu0 0
        %687 = vmatprep.subr.bf16.mxu0 0
        %688 = vmatpush1.bf16.msra.mxu0 0
        %689 = vmatprep.subr.bf16.mxu0 0
        %690 = vmatpush1.bf16.msra.mxu0 0
        %691 = vmatprep.subr.bf16.mxu0 0
        %692 = vmatpush1.bf16.msra.mxu0 0
        %693 = vmatprep.subr.bf16.mxu0 0
        %694 = vmatpush1.bf16.msra.mxu0 0
        %695 = vmatprep.subr.bf16.mxu0 0
        %696 = vmatpush1.bf16.msra.mxu0 0
        %697 = vmatprep.subr.bf16.mxu0 0
        %698 = vmatpush1.bf16.msra.mxu0 0
        %699 = vmatprep.subr.bf16.mxu0 0
        %700 = vmatpush1.bf16.msra.mxu0 0
        %701 = vmatprep.subr.bf16.mxu0 0
        %702 = vmatpush1.bf16.msra.mxu0 0
        %703 = vmatprep.mubr.bf16.mxu0 0
        %704 = vmatmul.mubr.bf16.gmra.mrb[0].mxu0 %v660
        %v705 = vpop.f32.mrb[0].mxu0
        %v706 = vadd.f32 0.0, %v705
        %v707 = vpop.f32.mrb[0].mxu0
        %v708 = vpop.f32.mrb[0].mxu0
        %v709 = vadd.f32 0.0, %v708
        %v710 = vpop.f32.mrb[0].mxu0
        %711 = vmatprep.mubr.bf16.mxu0 0
        %712 = vmatmul.mubr.bf16.gmra.mrb[0].mxu0 %v663
        %v713 = vpop.f32.mrb[0].mxu0
        %v714 = vadd.f32 0.0, %v713
        %v715 = vpop.f32.mrb[0].mxu0
        %v716 = vpop.f32.mrb[0].mxu0
        %v717 = vadd.f32 0.0, %v716
        %v718 = vpop.f32.mrb[0].mxu0
        %719 = vmatprep.mubr.bf16.mxu0 0
        %720 = vmatmul.mubr.bf16.gmra.mrb[0].mxu0 %v666
        %v721 = vpop.f32.mrb[0].mxu0
        %v722 = vadd.f32 0.0, %v721
        %v723 = vpop.f32.mrb[0].mxu0
        %v724 = vpop.f32.mrb[0].mxu0
        %v725 = vadd.f32 0.0, %v724
        %v726 = vpop.f32.mrb[0].mxu0
        %727 = vmatprep.mubr.bf16.mxu0 0
        %728 = vmatmul.mubr.bf16.gmra.mrb[0].mxu0 %v669
        %v729 = vpop.f32.mrb[0].mxu0
        %v730 = vadd.f32 0.0, %v729
        %v731 = vpop.f32.mrb[0].mxu0
        %v732 = vpop.f32.mrb[0].mxu0
        %v733 = vadd.f32 0.0, %v732
        %v734 = vpop.f32.mrb[0].mxu0
        %735 = vdwg.mxu0
        %v736 = vadd.f32 %v614, %v706
        %v737 = vadd.f32 %v615, %v709
        %v738 = vadd.f32 %v616, %v714
        %v739 = vadd.f32 %v617, %v717
        %v740 = vadd.f32 %v618, %v722
        %v741 = vadd.f32 %v619, %v725
        %v742 = vadd.f32 %v620, %v730
        %v743 = vadd.f32 %v621, %v733
        %s744 = smul.u32 %s27, 8
        %s745 = ssub.s32 8, %s744
        %p746 = scmp.lt.s32.totalorder %s745, 8
        %s747 = scalar_select %p746, %s745, 8
        %p748 = scmp.gt.s32.totalorder %s747, 0
        %s749 = scalar_select %p748, %s747, 0
        %s750 = smul.u32 %s749, 8
        %v751 = vlaneseq
        %v752 = vshrl.u32 %v751, 7
        %v753 = vadd.s32 %v752, 8
        %v754 = vadd.s32 %v752, 16
        %v755 = vadd.s32 %v752, 24
        %v756 = vadd.s32 %v752, 32
        %v757 = vadd.s32 %v752, 40
        %v758 = vadd.s32 %v752, 48
        %v759 = vadd.s32 %v752, 56
        %v760 = vstv %s750
        %vm761 = vcmp.lt.s32.totalorder %v752, %v760
        %vm762 = vcmp.lt.s32.totalorder %v753, %v760
        %vm763 = vcmp.lt.s32.totalorder %v754, %v760
        %vm764 = vcmp.lt.s32.totalorder %v755, %v760
        %vm765 = vcmp.lt.s32.totalorder %v756, %v760
        %vm766 = vcmp.lt.s32.totalorder %v757, %v760
        %vm767 = vcmp.lt.s32.totalorder %v758, %v760
        %vm768 = vcmp.lt.s32.totalorder %v759, %v760
        %v769 = vsel %vm761, 1, 0
        %v770 = vsel %vm762, 1, 0
        %v771 = vsel %vm763, 1, 0
        %v772 = vsel %vm764, 1, 0
        %v773 = vsel %vm765, 1, 0
        %v774 = vsel %vm766, 1, 0
        %v775 = vsel %vm767, 1, 0
        %v776 = vsel %vm768, 1, 0
        %vm777 = vcmp.eq.s32.totalorder %v769, 1
        %vm778 = vcmp.eq.s32.totalorder %v770, 1
        %vm779 = vcmp.eq.s32.totalorder %v771, 1
        %vm780 = vcmp.eq.s32.totalorder %v772, 1
        %vm781 = vcmp.eq.s32.totalorder %v773, 1
        %vm782 = vcmp.eq.s32.totalorder %v774, 1
        %vm783 = vcmp.eq.s32.totalorder %v775, 1
        %vm784 = vcmp.eq.s32.totalorder %v776, 1
        %v785 = vsel %vm777, %v736, 0.0
        %v786 = vsel %vm778, %v737, 0.0
        %v787 = vsel %vm779, %v738, 0.0
        %v788 = vsel %vm780, %v739, 0.0
        %v789 = vsel %vm781, %v740, 0.0
        %v790 = vsel %vm782, %v741, 0.0
        %v791 = vsel %vm783, %v742, 0.0
        %v792 = vsel %vm784, %v743, 0.0
        %v793 = vadd.f32 %v785, %v786
        %v794 = vadd.f32 %v793, %v787
        %v795 = vadd.f32 %v794, %v788
        %v796 = vadd.f32 %v795, %v789
        %v797 = vadd.f32 %v796, %v790
        %v798 = vadd.f32 %v797, %v791
        %v799 = vadd.f32 %v798, %v792
        %v800 = vrot.slane %v799, 4
        %v801 = vadd.f32 %v799, %v800
        %v802 = vrot.slane %v801, 2
        %v803 = vadd.f32 %v801, %v802
        %v804 = vrot.slane %v803, 1
        %v805 = vadd.f32 %v803, %v804
        %806 = vst [vmem:[%s252] sm:$0x1] %v805
        %v807 = vmul.f32 %v785, %v785
        %v808 = vmul.f32 %v786, %v786
        %v809 = vmul.f32 %v787, %v787
        %v810 = vmul.f32 %v788, %v788
        %v811 = vmul.f32 %v789, %v789
        %v812 = vmul.f32 %v790, %v790
        %v813 = vmul.f32 %v791, %v791
        %v814 = vmul.f32 %v792, %v792
        %v815 = vadd.f32 %v807, %v808
        %v816 = vadd.f32 %v815, %v809
        %v817 = vadd.f32 %v816, %v810
        %v818 = vadd.f32 %v817, %v811
        %v819 = vadd.f32 %v818, %v812
        %v820 = vadd.f32 %v819, %v813
        %v821 = vadd.f32 %v820, %v814
        %v822 = vrot.slane %v821, 4
        %v823 = vadd.f32 %v821, %v822
        %v824 = vrot.slane %v823, 2
        %v825 = vadd.f32 %v823, %v824
        %v826 = vrot.slane %v825, 1
        %v827 = vadd.f32 %v825, %v826
        %828 = vst [vmem:[%s252 + $0x1] sm:$0x1] %v827
        %v829 = vpack.c.bf16 %v737, %v736
        %v830 = vpack.c.bf16 %v739, %v738
        %v831 = vpack.c.bf16 %v741, %v740
        %v832 = vpack.c.bf16 %v743, %v742
        %v837 = vunpack.c.l.b16 %v829
        %v838 = vunpack.c.h.b16 %v829
        %v839 = vunpack.c.l.b16 %v830
        %v840 = vunpack.c.h.b16 %v830
        %v841 = vunpack.c.l.b16 %v831
        %v842 = vunpack.c.h.b16 %v831
        %v843 = vunpack.c.l.b16 %v832
        %v844 = vunpack.c.h.b16 %v832
        %v845 = vpack.c.b16 %v837, %v837
        %v846 = vpack.c.b16 %v838, %v838
        %v847 = vpack.c.b16 %v839, %v839
        %v848 = vpack.c.b16 %v840, %v840
        %v849 = vpack.c.b16 %v841, %v841
        %v850 = vpack.c.b16 %v842, %v842
        %v851 = vpack.c.b16 %v843, %v843
        %v852 = vpack.c.b16 %v844, %v844
        %861 = vst [vmem:[%s245] sm:$0xf] %v845
        %862 = vst [vmem:[%s245 + $0x4] sm:$0xf] %v846
        %863 = vst [vmem:[%s245 + $0x8] sm:$0xf] %v847
        %864 = vst [vmem:[%s245 + $0xc] sm:$0xf] %v848
        %865 = vst [vmem:[%s245 + $0x10] sm:$0xf] %v849
        %866 = vst [vmem:[%s245 + $0x14] sm:$0xf] %v850
        %867 = vst [vmem:[%s245 + $0x18] sm:$0xf] %v851
        %868 = vst [vmem:[%s245 + $0x1c] sm:$0xf] %v852
        %s869 = sand.u32 %s121, 1
        %s870 = scalar_lea.sflag [#allocation3], %s869
        %s871 = sand.u32 %s121, 1
        %s872 = smul.addr %s871, 32
        %s873 = scalar_lea.vmem [#allocation2], %s872
        %s874 = sand.u32 %s149, 1
        %s875 = scalar_lea.sflag [#allocation5], %s874
        %s876 = sand.u32 %s149, 1
        %s877 = smul.addr %s876, 2
        %s878 = scalar_lea.vmem [#allocation4], %s877
        // Predicated region
        $region33: #{tpu_custom_call.1} parent=31 // pred_check
          %p879 = pneg %p131
        $region34: #{tpu_custom_call.1} parent=31 // pred_check_branch
          %881 = sbr.rel (%p879) target = $region36
        $region35: #{tpu_custom_call.1} parent=31 // pred_region
          %s883 = ssub.s32 512, 512
          %884 = vsyncadd %s870, %s883
          %s885 = smul.addr %s27, 8
          %s886 = smul.addr %s26, 8
          %s887 = sadd.s32 %s885, %s886
          %s888 = smul.addr %s887, 64
          %s889 = scalar_lea.hbm %s3, %s888
          %s890 = sshll.u32 %s873, 4
          %s891 = int_to_ptr.vmem [resolvable:$true] %s890
          %896 = dma.vmem_to_hbm [thread:$0]  %s891, 512, %s889, %s870, 64, 64, 4
        $region36: #{tpu_custom_call.1} parent=31 // pred_fallthru
          _
        // Predicated region
        $region37: #{tpu_custom_call.1} parent=31 // pred_check
          %p897 = pneg %p159
        $region38: #{tpu_custom_call.1} parent=31 // pred_check_branch
          %899 = sbr.rel (%p897) target = $region40
        $region39: #{tpu_custom_call.1} parent=31 // pred_region
          %s901 = ssub.s32 32, 32
          %902 = vsyncadd %s875, %s901
          %s903 = sadd.s32 %s27, %s26
          %s904 = smul.addr %s903, 32
          %s905 = scalar_lea.hbm %s4, %s904
          %s907 = sshll.u32 %s878, 4
          %s908 = int_to_ptr.vmem [resolvable:$true] %s907
          %910 = dma.vmem_to_hbm [thread:$0]  %s908, 32, %s905, %s875
        $region40: #{tpu_custom_call.1} parent=31 // pred_fallthru
          _
      $region32: #{tpu_custom_call.1} parent=5 // pred_fallthru
        _
      %p911 = scmp.le.s32.totalorder 2, %s17
      // Predicated region
      $region41: #{tpu_custom_call.1} parent=5 // pred_check
        %p912 = pneg %p911
      $region42: #{tpu_custom_call.1} parent=5 // pred_check_branch
        %914 = sbr.rel (%p912) target = $region44
      $region43: #{tpu_custom_call.1} parent=5 // pred_region
        %s915 = ssub.s32 %s17, 2
        // Predicated region
        $region45: #{tpu_custom_call.1} parent=43 // pred_check
          %p916 = pneg %p137
        $region46: #{tpu_custom_call.1} parent=43 // pred_check_branch
          %918 = sbr.rel (%p916) target = $region48
        $region47: #{tpu_custom_call.1} parent=43 // pred_region
          %s919 = sand.u32 %s122, 1
          %s920 = scalar_lea.sflag [#allocation3], %s919
          %s921 = sand.u32 %s122, 1
          %s922 = smul.addr %s921, 32
          %s923 = scalar_lea.vmem [#allocation2], %s922
          %924 = dma.done %s920, 512
        $region48: #{tpu_custom_call.1} parent=43 // pred_fallthru
          _
        // Predicated region
        $region49: #{tpu_custom_call.1} parent=43 // pred_check
          %p925 = pneg %p165
        $region50: #{tpu_custom_call.1} parent=43 // pred_check_branch
          %927 = sbr.rel (%p925) target = $region52
        $region51: #{tpu_custom_call.1} parent=43 // pred_region
          %s928 = sand.u32 %s150, 1
          %s929 = scalar_lea.sflag [#allocation5], %s928
          %s930 = sand.u32 %s150, 1
          %s931 = smul.addr %s930, 2
          %s932 = scalar_lea.vmem [#allocation4], %s931
          %933 = dma.done %s929, 32
        $region52: #{tpu_custom_call.1} parent=43 // pred_fallthru
          _
      $region44: #{tpu_custom_call.1} parent=5 // pred_fallthru
        _
    $region6: #{tpu_custom_call.1} parent=1 // loop_footer
      %s21 = sadd.s32 1, %s17
    $region7: #{tpu_custom_call.1} parent=1 // loop_footer_branch
      %16 = sbr.rel target = $region3
    $region8: #{tpu_custom_call.1} parent=1 // loop_exit
      _
    %934 = vsyncpa [#allocation3], 1
    %s935 = scalar_lea.sflag [#allocation3], 1
    %936 = vsyncpa %s935, 1
    %937 = vsyncpa [#allocation5], 1
    %s938 = scalar_lea.sflag [#allocation5], 1
    %939 = vsyncpa %s938, 1

</llo_original>
